<compile_context>
chip_gen: v6e
topology: v6e:2x2x1
jax: 0.10.0
libtpu: 0.0.40
codegen_flags: <defaults>
</compile_context>

<pallas_src>
import functools

import jax
import jax.numpy as jnp
from jax.experimental import pallas as pl
from jax.experimental.pallas import tpu as pltpu


_TARGET_BLOCK_BYTES = 2 * 1024 * 1024     # ~2 MiB per pipelined block
_MAX_VMEM_LIMIT = 64 * 1024 * 1024


def _sublane_pack(itemsize):
    # minimum sublane multiple for packed tiles: 8 (f32), 16 (bf16), 32 (i8)
    return max(8, 32 // max(1, itemsize))


def _vmem_limit(block_bytes):
    # 2 in-buffers + 2 out-buffers + in-kernel f32 working set; 32 MiB is
    # ample for 2 MiB blocks and leaves headroom for surrounding fusions.
    return int(min(_MAX_VMEM_LIMIT, max(32 * 1024 * 1024, 12 * block_bytes)))


def _pick_row_tile(rows, width, itemsize):
    """Row tile for 2-D (rows, width) streaming: ~2 MiB blocks, sublane-packed,
    and enough grid steps for pipelining / megacore when possible."""
    pack = _sublane_pack(itemsize)
    if rows <= pack:
        return rows                      # block dim == full array dim
    per_row = width * itemsize
    tm = max(pack, _TARGET_BLOCK_BYTES // max(1, per_row))
    tm = (tm // pack) * pack
    tm = min(tm, 2048)
    while tm > pack and pl.cdiv(rows, tm) < 8:
        tm = max(pack, ((tm // 2) // pack) * pack)
    return tm


# ---------------------------------------------------------------------------
# Kernels (all two-pass statistics in f32)
# ---------------------------------------------------------------------------
def _ln_lanes_kernel(x_ref, wb_ref, o_ref, *, eps, inv_c):
    # x_ref: (tm, C); normalize over the lane axis.  wb_ref: (2, C) f32.
    x = x_ref[...].astype(jnp.float32)
    mean = jnp.sum(x, axis=-1, keepdims=True) * inv_c
    d = x - mean
    var = jnp.sum(d * d, axis=-1, keepdims=True) * inv_c
    inv = jax.lax.rsqrt(var + eps)
    o_ref[...] = (d * inv * wb_ref[0:1, :] + wb_ref[1:2, :]).astype(o_ref.dtype)


def _ln_packed_kernel(x_ref, wb_ref, m_ref, o_ref, *, eps, inv_c):
    # x_ref: (tm, k*C) — each 128-lane row carries k independent rows of len C.
    # m_ref: (kC, kC) block-diagonal 0/1 indicator.  x @ M gives each segment's
    # sum already broadcast across its C lanes (MXU is otherwise idle;
    # HIGHEST precision keeps the statistics at ~f32 accuracy).
    x = x_ref[...].astype(jnp.float32)
    m = m_ref[...]
    mean = jnp.dot(x, m, preferred_element_type=jnp.float32,
                   precision=jax.lax.Precision.HIGHEST) * inv_c
    d = x - mean
    var = jnp.dot(d * d, m, preferred_element_type=jnp.float32,
                  precision=jax.lax.Precision.HIGHEST) * inv_c
    inv = jax.lax.rsqrt(var + eps)
    o_ref[...] = (d * inv * wb_ref[0:1, :] + wb_ref[1:2, :]).astype(o_ref.dtype)


def _ln_sublanes_kernel(x_ref, wb_ref, o_ref, *, eps, inv_c):
    # x_ref: (nb, C, tl); reduce over axis=1 (C on sublanes, spatial on lanes).
    x = x_ref[...].astype(jnp.float32)
    mean = jnp.sum(x, axis=1, keepdims=True) * inv_c
    d = x - mean
    var = jnp.sum(d * d, axis=1, keepdims=True) * inv_c
    inv = jax.lax.rsqrt(var + eps)
    o_ref[...] = (d * inv * wb_ref[0:1] + wb_ref[1:2]).astype(o_ref.dtype)


# ---------------------------------------------------------------------------
# Wrappers
# ---------------------------------------------------------------------------
def _layernorm_channels_last(x2d, weight, bias, eps):
    rows, c = x2d.shape
    itemsize = jnp.dtype(x2d.dtype).itemsize

    # Lane-pack small C so output stores are unmasked / lane-dense.
    k = 1
    if c < 128 and 128 % c == 0:
        kk = 128 // c
        if rows % kk == 0 and rows >= kk:
            k = kk

    if k > 1:
        kc = k * c
        rp = rows // k
        xp = x2d.reshape(rp, kc)                     # contiguous view (free)
        wb = jnp.stack([jnp.tile(weight.astype(jnp.float32), k),
                        jnp.tile(bias.astype(jnp.float32), k)], axis=0)
        seg = jnp.arange(kc, dtype=jnp.int32) // c
        m = (seg[:, None] == seg[None, :]).astype(jnp.float32)
        tm = _pick_row_tile(rp, kc, itemsize)
        block_bytes = tm * kc * itemsize
        kernel = functools.partial(_ln_packed_kernel, eps=eps, inv_c=1.0 / c)
        yp = pl.pallas_call(
            kernel,
            out_shape=jax.ShapeDtypeStruct((rp, kc), x2d.dtype),
            grid_spec=pltpu.PrefetchScalarGridSpec(
                num_scalar_prefetch=0,
                grid=(pl.cdiv(rp, tm),),
                in_specs=[
                    pl.BlockSpec((tm, kc), lambda i: (i, 0)),
                    pl.BlockSpec((2, kc), lambda i: (0, 0)),    # resident
                    pl.BlockSpec((kc, kc), lambda i: (0, 0)),   # resident
                ],
                out_specs=pl.BlockSpec((tm, kc), lambda i: (i, 0)),
            ),
            compiler_params=pltpu.CompilerParams(
                dimension_semantics=("parallel",),
                vmem_limit_bytes=_vmem_limit(block_bytes),
            ),
        )(xp, wb, m)
        return yp.reshape(rows, c)

    # Plain path (C >= 128, or packing not possible).
    wb = jnp.stack([weight.astype(jnp.float32), bias.astype(jnp.float32)], axis=0)
    tm = _pick_row_tile(rows, c, itemsize)
    block_bytes = tm * c * itemsize
    kernel = functools.partial(_ln_lanes_kernel, eps=eps, inv_c=1.0 / c)
    return pl.pallas_call(
        kernel,
        out_shape=jax.ShapeDtypeStruct((rows, c), x2d.dtype),
        grid_spec=pltpu.PrefetchScalarGridSpec(
            num_scalar_prefetch=0,
            grid=(pl.cdiv(rows, tm),),
            in_specs=[
                pl.BlockSpec((tm, c), lambda i: (i, 0)),
                pl.BlockSpec((2, c), lambda i: (0, 0)),         # resident
            ],
            out_specs=pl.BlockSpec((tm, c), lambda i: (i, 0)),
        ),
        compiler_params=pltpu.CompilerParams(
            dimension_semantics=("parallel",),
            vmem_limit_bytes=_vmem_limit(block_bytes),
        ),
    )(x2d, wb)


def _layernorm_channels_first(x, weight, bias, eps):
    n, c, h, w = x.shape
    L = h * w
    itemsize = jnp.dtype(x.dtype).itemsize
    x3d = x.reshape(n, c, L)
    wb = jnp.stack([weight.astype(jnp.float32),
                    bias.astype(jnp.float32)], axis=0).reshape(2, c, 1)
    img_bytes = c * L * itemsize
    kernel = functools.partial(_ln_sublanes_kernel, eps=eps, inv_c=1.0 / c)

    if img_bytes <= _TARGET_BLOCK_BYTES:
        # Small spatial extent: batch whole images per grid step so each DMA
        # is one large contiguous slab (amortizes the ~0.35 us/step overhead).
        nb = int(min(n, max(1, _TARGET_BLOCK_BYTES // max(1, img_bytes))))
        while nb > 1 and pl.cdiv(n, nb) < 8 and nb * img_bytes > 256 * 1024:
            nb = max(1, nb // 2)
        block_bytes = nb * img_bytes
        grid = (pl.cdiv(n, nb),)
        in_specs = [
            pl.BlockSpec((nb, c, L), lambda i: (i, 0, 0)),
            pl.BlockSpec((2, c, 1), lambda i: (0, 0, 0)),       # resident
        ]
        out_spec = pl.BlockSpec((nb, c, L), lambda i: (i, 0, 0))
        dims = ("parallel",)
    else:
        # Large spatial extent: tile H*W in 128-lane multiples, one image/step.
        tl = max(128, (_TARGET_BLOCK_BYTES // (c * itemsize) // 128) * 128)
        tl = min(tl, ((L + 127) // 128) * 128)
        block_bytes = c * tl * itemsize
        grid = (n, pl.cdiv(L, tl))
        in_specs = [
            pl.BlockSpec((1, c, tl), lambda i, j: (i, 0, j)),
            pl.BlockSpec((2, c, 1), lambda i, j: (0, 0, 0)),    # resident
        ]
        out_spec = pl.BlockSpec((1, c, tl), lambda i, j: (i, 0, j))
        dims = ("parallel", "parallel")

    y3d = pl.pallas_call(
        kernel,
        out_shape=jax.ShapeDtypeStruct((n, c, L), x.dtype),
        grid_spec=pltpu.PrefetchScalarGridSpec(
            num_scalar_prefetch=0,
            grid=grid,
            in_specs=in_specs,
            out_specs=out_spec,
        ),
        compiler_params=pltpu.CompilerParams(
            dimension_semantics=dims,
            vmem_limit_bytes=_vmem_limit(block_bytes),
        ),
    )(x3d, wb)
    return y3d.reshape(n, c, h, w)


class LayerNorm:
    """JAX/Pallas port of the PyTorch LayerNorm supporting channels_last
    (..., C) and channels_first (N, C, H, W) data formats."""

    def __init__(self, normalized_shape, eps=1e-6, data_format="channels_last"):
        if data_format not in ("channels_last", "channels_first"):
            raise NotImplementedError
        self.normalized_shape = (normalized_shape,)
        self.eps = eps
        self.data_format = data_format
        self.weight = jnp.ones((normalized_shape,), dtype=jnp.float32)
        self.bias = jnp.zeros((normalized_shape,), dtype=jnp.float32)

    def __call__(self, x):
        c = self.normalized_shape[0]
        if self.data_format == "channels_last":
            assert x.shape[-1] == c
            lead = x.shape[:-1]
            y2d = _layernorm_channels_last(x.reshape(-1, c),
                                           self.weight, self.bias, self.eps)
            return y2d.reshape(*lead, c)
        assert x.shape[1] == c
        return _layernorm_channels_first(x, self.weight, self.bias, self.eps)


# ---------------------------------------------------------------------------
# References + smoke test
# ---------------------------------------------------------------------------
def _ref_channels_last(x, w, b, eps):
    x = x.astype(jnp.float32)
    mean = jnp.mean(x, axis=-1, keepdims=True)
    var = jnp.mean((x - mean) ** 2, axis=-1, keepdims=True)
    return (x - mean) / jnp.sqrt(var + eps) * w + b


def _ref_channels_first(x, w, b, eps):
    x = x.astype(jnp.float32)
    u = jnp.mean(x, axis=1, keepdims=True)
    s = jnp.mean((x - u) ** 2, axis=1, keepdims=True)
    xn = (x - u) / jnp.sqrt(s + eps)
    return w[:, None, None] * xn + b[:, None, None]


if __name__ == "__main__":
    key = jax.random.PRNGKey(0)
    k1, k2, k3 = jax.random.split(key, 3)

    # channels_first: NCHW, normalize over C, transpose-free, batched images.
    x_cf = jax.random.normal(k1, (2, 4, 16, 16), dtype=jnp.float32)
    ln_cf = LayerNorm(4, eps=1e-6, data_format="channels_first")
    ln_cf.weight = jnp.arange(1, 5, dtype=jnp.float32) * 0.5
    ln_cf.bias = jnp.arange(4, dtype=jnp.float32) * 0.1
    y_cf = jax.block_until_ready(ln_cf(x_cf))
    ref_cf = _ref_channels_first(x_cf, ln_cf.weight, ln_cf.bias, ln_cf.eps)
    assert y_cf.shape == x_cf.shape
    assert jnp.allclose(y_cf, ref_cf, atol=1e-5, rtol=1e-5)

    # channels_last, C=32 < 128: exercises the lane-packed (k=4) path.
    x_cl = jax.random.normal(k2, (2, 8, 8, 32), dtype=jnp.float32)
    ln_cl = LayerNorm(32, eps=1e-6, data_format="channels_last")
    ln_cl.weight = 1.0 + 0.01 * jnp.arange(32, dtype=jnp.float32)
    ln_cl.bias = 0.02 * jnp.arange(32, dtype=jnp.float32)
    y_cl = jax.block_until_ready(ln_cl(x_cl))
    ref_cl = _ref_channels_last(x_cl, ln_cl.weight, ln_cl.bias, ln_cl.eps)
    assert y_cl.shape == x_cl.shape
    assert jnp.allclose(y_cl, ref_cl, atol=1e-5, rtol=1e-5)

    # channels_last bf16, C=64: exercises bf16 sublane packing + f32 upcast.
    x_bf = jax.random.normal(k3, (2, 4, 8, 64), dtype=jnp.bfloat16)
    ln_bf = LayerNorm(64, eps=1e-6, data_format="channels_last")
    y_bf = jax.block_until_ready(ln_bf(x_bf))
    ref_bf = _ref_channels_last(x_bf, ln_bf.weight, ln_bf.bias, ln_bf.eps)
    assert y_bf.shape == x_bf.shape
    assert jnp.allclose(y_bf.astype(jnp.float32), ref_bf, atol=2e-2, rtol=2e-2)

    print("KERNEL_OK")
</pallas_src>

<mosaic_0001>
module attributes {stable_mosaic.version = 11 : i64} {
  func.func @_ln_sublanes_kernel(%arg0: i32, %arg1: memref<2x4x256xf32, #tpu.memory_space<vmem>>, %arg2: memref<2x4x1xf32, #tpu.memory_space<vmem>>, %arg3: memref<2x4x256xf32, #tpu.memory_space<vmem>>) attributes {dimension_semantics = [#tpu.dimension_semantics<parallel>], iteration_bounds = array<i64: 1>, scalar_prefetch = 0 : i64, scratch_operands = 0 : i64, tpu.core_type = #tpu.core_type<tc>, window_params = [{transform_indices = @transform_0, window_bounds = array<i64: 2, 4, 256>}, {pipeline_mode = #tpu.pipeline_mode<synchronous>, transform_indices = @transform_1, window_bounds = array<i64: 2, 4, 1>}, {transform_indices = @transform_2, window_bounds = array<i64: 2, 4, 256>}]} {
    %c0 = arith.constant 0 : index
    %c0_0 = arith.constant 0 : index
    %c0_1 = arith.constant 0 : index
    %0 = vector.load %arg1[%c0, %c0_0, %c0_1] : memref<2x4x256xf32, #tpu.memory_space<vmem>>, vector<2x4x256xf32>
    %cst = arith.constant dense<0.000000e+00> : vector<2x256xf32>
    %1 = vector.multi_reduction <add>, %0, %cst [1] : vector<2x4x256xf32> to vector<2x256xf32>
    %2 = vector.shape_cast %1 : vector<2x256xf32> to vector<2x1x256xf32>
    %cst_2 = arith.constant 2.500000e-01 : f32
    %3 = vector.broadcast %cst_2 : f32 to vector<2x1x256xf32>
    %4 = arith.mulf %2, %3 : vector<2x1x256xf32>
    %5 = vector.broadcast %4 : vector<2x1x256xf32> to vector<2x4x256xf32>
    %6 = arith.subf %0, %5 : vector<2x4x256xf32>
    %7 = arith.mulf %6, %6 : vector<2x4x256xf32>
    %cst_3 = arith.constant dense<0.000000e+00> : vector<2x256xf32>
    %8 = vector.multi_reduction <add>, %7, %cst_3 [1] : vector<2x4x256xf32> to vector<2x256xf32>
    %9 = vector.shape_cast %8 : vector<2x256xf32> to vector<2x1x256xf32>
    %cst_4 = arith.constant 2.500000e-01 : f32
    %10 = vector.broadcast %cst_4 : f32 to vector<2x1x256xf32>
    %11 = arith.mulf %9, %10 : vector<2x1x256xf32>
    %cst_5 = arith.constant 9.99999997E-7 : f32
    %12 = vector.broadcast %cst_5 : f32 to vector<2x1x256xf32>
    %13 = arith.addf %11, %12 : vector<2x1x256xf32>
    %14 = math.rsqrt %13 : vector<2x1x256xf32>
    %15 = vector.broadcast %14 : vector<2x1x256xf32> to vector<2x4x256xf32>
    %16 = arith.mulf %6, %15 : vector<2x4x256xf32>
    %c0_6 = arith.constant 0 : index
    %c0_7 = arith.constant 0 : index
    %c0_8 = arith.constant 0 : index
    %17 = vector.load %arg2[%c0_6, %c0_7, %c0_8] : memref<2x4x1xf32, #tpu.memory_space<vmem>>, vector<1x4x1xf32>
    %18 = vector.broadcast %17 : vector<1x4x1xf32> to vector<2x4x256xf32>
    %19 = arith.mulf %16, %18 : vector<2x4x256xf32>
    %c1 = arith.constant 1 : index
    %c0_9 = arith.constant 0 : index
    %c0_10 = arith.constant 0 : index
    %20 = vector.load %arg2[%c1, %c0_9, %c0_10] : memref<2x4x1xf32, #tpu.memory_space<vmem>>, vector<1x4x1xf32>
    %21 = vector.broadcast %20 : vector<1x4x1xf32> to vector<2x4x256xf32>
    %22 = arith.addf %19, %21 : vector<2x4x256xf32>
    %c0_11 = arith.constant 0 : index
    %c0_12 = arith.constant 0 : index
    %c0_13 = arith.constant 0 : index
    %23 = vector.load %arg3[%c0_11, %c0_12, %c0_13] : memref<2x4x256xf32, #tpu.memory_space<vmem>>, vector<2x4x256xf32>
    tpu.vector_store %arg3[%c0_11, %c0_12, %c0_13], %22 {strides = array<i32>} : memref<2x4x256xf32, #tpu.memory_space<vmem>>, vector<2x4x256xf32>,
    return
  }
  func.func @transform_0(%arg0: i32) -> (i32, i32, i32) {
    %c0_i32 = arith.constant 0 : i32
    %c0_i32_0 = arith.constant 0 : i32
    %c0_i32_1 = arith.constant 0 : i32
    return %arg0, %c0_i32, %c0_i32_0 : i32, i32, i32
  }
  func.func @transform_1(%arg0: i32) -> (i32, i32, i32) {
    %c0_i32 = arith.constant 0 : i32
    %c0_i32_0 = arith.constant 0 : i32
    %c0_i32_1 = arith.constant 0 : i32
    %c0_i32_2 = arith.constant 0 : i32
    return %c0_i32, %c0_i32_0, %c0_i32_1 : i32, i32, i32
  }
  func.func @transform_2(%arg0: i32) -> (i32, i32, i32) {
    %c0_i32 = arith.constant 0 : i32
    %c0_i32_0 = arith.constant 0 : i32
    %c0_i32_1 = arith.constant 0 : i32
    return %arg0, %c0_i32, %c0_i32_0 : i32, i32, i32
  }
}

</mosaic_0001>

<llo_original>
// kernel: tpu_custom_call.1
$region0: #{tpu_custom_call.1}
  #allocation0 [shape = 'u32[]', space=smem, size = 0x4, offset = 0x4, fixed_abs, tag = 'smem constant byte address 0x4 - core index']
  #allocation1 [shape = 'u32[144,128]{1,0:T(1,128)}', space=vmem, size = 0x12000, scoped, tag = 'internal scratch']
  %s0 = inlined_call_operand.hbm [shape: f32[2,4,256], index: 0, kind: input, shape index: {}]
  %s1 = inlined_call_operand.vmem [shape: f32[2,4,1], index: 1, kind: input, shape index: {}]
  %s2 = inlined_call_operand.hbm [shape: f32[2,4,256], index: 2, kind: output, shape index: {}]
  %s3 = sld [smem:[#allocation0]]
  $region22: #{tpu_custom_call.1} parent=0
    _
  %s5 = ssub.s32 1, %s3
  %s6 = scalar_select 0, %s5, %s3
  $region1: #{tpu_custom_call.1} parent=0
    #allocation2 [shape = 'u8[8192]{0}', space=vmem, size = 0x2000, scoped, tag = 'input window, operand 0, single buffered']
    #allocation3 [shape = 's32[1]{0}', space=sflag, size = 0x4, scoped, tag = 'scoped memory for tpu_custom_call.1']
    #allocation4 [shape = 's32[1]{0}', space=sflag, size = 0x4, scoped, tag = 'scoped memory for tpu_custom_call.1']
    #allocation5 [shape = 'u8[8192]{0}', space=vmem, size = 0x2000, scoped, tag = 'output window, operand 0, single buffered']
    %7 = vsyncpa [#allocation3], 0
    %8 = vsyncpa [#allocation4], 0
    // Predicated region
    $region2: #{tpu_custom_call.1} parent=1 // pred_check
      _
    $region3: #{tpu_custom_call.1} parent=1 // pred_check_branch
      %10 = sbr.rel (0) target = $region5
    $region4: #{tpu_custom_call.1} parent=1 // pred_region
      %s12 = ssub.s32 256, 256
      %13 = vsyncadd [#allocation3], %s12
      %s14 = sshll.u32 [#allocation2], 4
      %s15 = int_to_ptr.vmem [resolvable:$true] %s14
      %20 = dma.hbm_to_vmem [thread:$0]  %s0, 256, %s15, [#allocation3], 128, 128, 8
    $region5: #{tpu_custom_call.1} parent=1 // pred_fallthru
      _
    // Predicated region
    $region6: #{tpu_custom_call.1} parent=1 // pred_check
      _
    $region7: #{tpu_custom_call.1} parent=1 // pred_check_branch
      %22 = sbr.rel (0) target = $region9
    $region8: #{tpu_custom_call.1} parent=1 // pred_region
      _
    $region9: #{tpu_custom_call.1} parent=1 // pred_fallthru
      _
    // Predicated region
    $region10: #{tpu_custom_call.1} parent=1 // pred_check
      _
    $region11: #{tpu_custom_call.1} parent=1 // pred_check_branch
      %24 = sbr.rel (0) target = $region13
    $region12: #{tpu_custom_call.1} parent=1 // pred_region
      %25 = dma.done [#allocation3], 256
    $region13: #{tpu_custom_call.1} parent=1 // pred_fallthru
      _
    %v26 = vld [vmem:[#allocation2] sm:$0xff]
    %v27 = vld [vmem:[#allocation2 + $0x8] sm:$0xff]
    %v30 = vcombine.high %v26, %v26
    %v31 = vcombine.high %v27, %v27
    %vm34 = vcmask 1043456
    %v35 = vsel %vm34, %v26, 0.0
    %v36 = vrot.slane %v35, 4
    %v37 = vadd.f32 %v35, %v36
    %v38 = vrot.slane %v37, 2
    %v39 = vadd.f32 %v37, %v38
    %v40 = vrot.slane %v39, 1
    %v41 = vadd.f32 %v39, %v40
    %v42 = vsel %vm34, %v30, 0.0
    %v43 = vrot.slane %v42, 4
    %v44 = vadd.f32 %v42, %v43
    %v45 = vrot.slane %v44, 2
    %v46 = vadd.f32 %v44, %v45
    %v47 = vrot.slane %v46, 1
    %v48 = vadd.f32 %v46, %v47
    %v49 = vsel %vm34, %v27, 0.0
    %v50 = vrot.slane %v49, 4
    %v51 = vadd.f32 %v49, %v50
    %v52 = vrot.slane %v51, 2
    %v53 = vadd.f32 %v51, %v52
    %v54 = vrot.slane %v53, 1
    %v55 = vadd.f32 %v53, %v54
    %v56 = vsel %vm34, %v31, 0.0
    %v57 = vrot.slane %v56, 4
    %v58 = vadd.f32 %v56, %v57
    %v59 = vrot.slane %v58, 2
    %v60 = vadd.f32 %v58, %v59
    %v61 = vrot.slane %v60, 1
    %v62 = vadd.f32 %v60, %v61
    %v63 = vmul.f32 %v41, 0.25
    %v64 = vmul.f32 %v48, 0.25
    %v65 = vmul.f32 %v55, 0.25
    %v66 = vmul.f32 %v62, 0.25
    %v71 = vcombine.low %v63, %v64
    %v72 = vcombine.low %v65, %v66
    %v75 = vsub.f32 %v26, %v71
    %v76 = vsub.f32 %v27, %v72
    %v77 = vmul.f32 %v75, %v75
    %v78 = vmul.f32 %v76, %v76
    %v81 = vcombine.high %v77, %v77
    %v82 = vcombine.high %v78, %v78
    %v85 = vsel %vm34, %v77, 0.0
    %v86 = vrot.slane %v85, 4
    %v87 = vadd.f32 %v85, %v86
    %v88 = vrot.slane %v87, 2
    %v89 = vadd.f32 %v87, %v88
    %v90 = vrot.slane %v89, 1
    %v91 = vadd.f32 %v89, %v90
    %v92 = vsel %vm34, %v81, 0.0
    %v93 = vrot.slane %v92, 4
    %v94 = vadd.f32 %v92, %v93
    %v95 = vrot.slane %v94, 2
    %v96 = vadd.f32 %v94, %v95
    %v97 = vrot.slane %v96, 1
    %v98 = vadd.f32 %v96, %v97
    %v99 = vsel %vm34, %v78, 0.0
    %v100 = vrot.slane %v99, 4
    %v101 = vadd.f32 %v99, %v100
    %v102 = vrot.slane %v101, 2
    %v103 = vadd.f32 %v101, %v102
    %v104 = vrot.slane %v103, 1
    %v105 = vadd.f32 %v103, %v104
    %v106 = vsel %vm34, %v82, 0.0
    %v107 = vrot.slane %v106, 4
    %v108 = vadd.f32 %v106, %v107
    %v109 = vrot.slane %v108, 2
    %v110 = vadd.f32 %v108, %v109
    %v111 = vrot.slane %v110, 1
    %v112 = vadd.f32 %v110, %v111
    %v113 = vmul.f32 %v91, 0.25
    %v114 = vmul.f32 %v98, 0.25
    %v115 = vmul.f32 %v105, 0.25
    %v116 = vmul.f32 %v112, 0.25
    %v117 = vadd.f32 %v113, 1e-06
    %v118 = vadd.f32 %v114, 1e-06
    %v119 = vadd.f32 %v115, 1e-06
    %v120 = vadd.f32 %v116, 1e-06
    %v121 = vrsqrt.pop %v117
    %v122 = vrsqrt.pop %v118
    %v123 = vrsqrt.pop %v119
    %v124 = vrsqrt.pop %v120
    %v129 = vcombine.low %v121, %v122
    %v130 = vcombine.low %v123, %v124
    %v133 = vmul.f32 %v75, %v129
    %v134 = vmul.f32 %v76, %v130
    %v135 = vld [vmem:[%s1] sm:$0xf]
    %137 = vset.pattern.permute.xlu0 0
    %138 = vperm.xlu0 %137, %v135
    %v139 = vpop.permute.xlu0 %138
    %v141 = vunpack.c.l.s4 839922192
    %v142 = vunpack.c.0.s8 %v141
    %v143 = vlaneseq
    %v144 = vshrl.u32 %v143, 7
    %v145 = vsub.s32 %v142, %v144
    %v146 = vrot.slane %v139, %v145
    %v148 = vmul.f32 %v133, %v146
    %v149 = vmul.f32 %v134, %v146
    %s150 = scalar_lea.vmem %s1, 4
    %v151 = vld [vmem:[%s150] sm:$0xf]
    %153 = vset.pattern.permute.xlu0 0
    %154 = vperm.xlu0 %153, %v151
    %v155 = vpop.permute.xlu0 %154
    %v157 = vunpack.c.l.s4 839922192
    %v158 = vunpack.c.0.s8 %v157
    %v159 = vlaneseq
    %v160 = vshrl.u32 %v159, 7
    %v161 = vsub.s32 %v158, %v160
    %v162 = vrot.slane %v155, %v161
    %v164 = vadd.f32 %v148, %v162
    %v165 = vadd.f32 %v149, %v162
    %166 = vst [vmem:[#allocation5] sm:$0xff] %v164
    %167 = vst [vmem:[#allocation5 + $0x8] sm:$0xff] %v165
    // Predicated region
    $region14: #{tpu_custom_call.1} parent=1 // pred_check
      _
    $region15: #{tpu_custom_call.1} parent=1 // pred_check_branch
      %169 = sbr.rel (0) target = $region17
    $region16: #{tpu_custom_call.1} parent=1 // pred_region
      %s171 = ssub.s32 256, 256
      %172 = vsyncadd [#allocation4], %s171
      %s173 = sshll.u32 [#allocation5], 4
      %s174 = int_to_ptr.vmem [resolvable:$true] %s173
      %179 = dma.vmem_to_hbm [thread:$0]  %s174, 256, %s2, [#allocation4], 128, 128, 8
    $region17: #{tpu_custom_call.1} parent=1 // pred_fallthru
      _
    // Predicated region
    $region18: #{tpu_custom_call.1} parent=1 // pred_check
      _
    $region19: #{tpu_custom_call.1} parent=1 // pred_check_branch
      %181 = sbr.rel (0) target = $region21
    $region20: #{tpu_custom_call.1} parent=1 // pred_region
      %182 = dma.done [#allocation4], 256
    $region21: #{tpu_custom_call.1} parent=1 // pred_fallthru
      _
    %183 = vsyncpa [#allocation3], 1
    %184 = vsyncpa [#allocation4], 1

</llo_original>
